<compile_context>
chip_gen: v7x
topology: tpu7x:2x2x1
jax: 0.10.0
libtpu: 0.0.40
codegen_flags: <defaults>
</compile_context>

<pallas_src>
import functools

import jax
import jax.numpy as jnp
from jax.experimental import pallas as pl
from jax.experimental.pallas import tpu as pltpu

_LANE = 128
_DEFAULT_BLOCK_BYTES = 4 * 1024 * 1024   # per-input block target (review: 2-4+ MiB)
_VMEM_LIMIT_BYTES = 48 * 1024 * 1024     # 2 inputs x 2 bufs x 4 MiB = 16 MiB << 48 MiB < 64 MiB (v7x)


def _attn_match_kernel(x_ref, t_ref, out_ref, *, measure, tn, n_total, mask_n):
    """One (TB, K, TN) tile: lanes = positions n, sublanes = classes/slots k, dim0 = folded batch."""
    x = x_ref[...].astype(jnp.float32)   # (TB, K, TN)
    t = t_ref[...].astype(jnp.float32)   # (TB, K, TN)

    if mask_n:
        # Tail tile overhangs N: zero the invalid lane columns (zero target => zero
        # contribution in both measures; zeroed x keeps the math finite).
        j = pl.program_id(1)
        col = j * tn + jax.lax.broadcasted_iota(jnp.int32, x.shape, dimension=2)
        valid = col < n_total
        x = jnp.where(valid, x, 0.0)
        t = jnp.where(valid, t, 0.0)

    if measure == "ce":
        # Column-wise log_softmax over the class axis (sublanes).
        m = jnp.max(x, axis=1, keepdims=True)
        z = x - m
        lse = jnp.log(jnp.sum(jnp.exp(z), axis=1, keepdims=True))
        contrib = -t * (z - lse)
    else:  # 'kl'
        # KLDivLoss(log_input=log(x), target=t): t * (log t - log x), 0 where t == 0.
        pos = t > 0.0
        safe_t = jnp.where(pos, t, 1.0)
        safe_x = jnp.where(pos, x, 1.0)
        contrib = jnp.where(pos, t * (jnp.log(safe_t) - jnp.log(safe_x)), 0.0)

    out_ref[...] = jnp.sum(contrib).reshape(1, 1, 1, 1)


def _largest_divisor_leq(n, cap):
    cap = max(1, min(n, cap))
    for d in range(cap, 0, -1):
        if n % d == 0:
            return d
    return 1


def _tile_plan(B, K, N, itemsize, block_bytes):
    """Pick (TB, TN) so one block is ~block_bytes, lane-dense, and layout-legal."""
    sublane = max(1, 32 // itemsize)                  # packed sublane quantum: 8 f32, 16 bf16
    k_pad = pl.cdiv(K, sublane) * sublane
    n_pad = pl.cdiv(N, _LANE) * _LANE
    full_row_bytes = k_pad * n_pad * itemsize         # one batch, full N (VMEM footprint)

    if n_pad <= _LANE or full_row_bytes <= block_bytes:
        # Whole N fits in one tile (tn == full array dim is always layout-legal); fold
        # multiple batches into the block so a grid step still moves ~block_bytes.
        tn, grid_n, mask_n = N, 1, False
        tb = _largest_divisor_leq(B, max(1, block_bytes // max(1, full_row_bytes)))
    else:
        # Tile N in lane-dense multiples of 128 sized by the byte budget (no lane cap).
        tn = max(_LANE, (block_bytes // (k_pad * itemsize)) // _LANE * _LANE)
        tn = min(tn, n_pad)
        grid_n = pl.cdiv(N, tn)
        mask_n = grid_n * tn != N
        tb = 1
    grid_b = B // tb
    return tb, tn, grid_b, grid_n, mask_n


def _forward(inp, target, weight, measure, block_bytes):
    B, K, N = inp.shape
    itemsize = max(jnp.dtype(inp.dtype).itemsize, jnp.dtype(target.dtype).itemsize)
    tb, tn, grid_b, grid_n, mask_n = _tile_plan(B, K, N, itemsize, block_bytes)

    kernel = functools.partial(
        _attn_match_kernel, measure=measure, tn=tn, n_total=N, mask_n=mask_n
    )

    elems = B * K * N
    cost = pl.CostEstimate(
        flops=6 * elems,
        transcendentals=elems if measure == "ce" else 2 * elems,
        bytes_accessed=(inp.dtype.itemsize + target.dtype.itemsize) * elems
        + 4 * grid_b * grid_n,
    )

    partials = pl.pallas_call(
        kernel,
        out_shape=jax.ShapeDtypeStruct((grid_b, grid_n, 1, 1), jnp.float32),
        grid_spec=pltpu.PrefetchScalarGridSpec(
            num_scalar_prefetch=0,
            grid=(grid_b, grid_n),
            in_specs=[
                pl.BlockSpec((tb, K, tn), lambda b, j: (b, 0, j)),
                pl.BlockSpec((tb, K, tn), lambda b, j: (b, 0, j)),
            ],
            out_specs=pl.BlockSpec((1, 1, 1, 1), lambda b, j: (b, j, 0, 0)),
        ),
        compiler_params=pltpu.CompilerParams(
            # Each grid point writes its own partial block -> both axes fully parallel.
            dimension_semantics=("parallel", "parallel"),
            vmem_limit_bytes=_VMEM_LIMIT_BYTES,
        ),
        cost_estimate=cost,
    )(inp, target)

    # Tiny final reduction + scaling in JAX. Both 'mean' (ce) and 'batchmean' (kl)
    # divide by B*N; weight is applied here as well.
    return (weight / (B * N)) * jnp.sum(partials)


@functools.partial(jax.custom_vjp, nondiff_argnums=(2, 3, 4))
def _attention_matching_loss(inp, target, weight, measure, block_bytes):
    return _forward(inp, target, weight, measure, block_bytes)


def _attn_loss_fwd(inp, target, weight, measure, block_bytes):
    return _forward(inp, target, weight, measure, block_bytes), (inp, target)


def _attn_loss_bwd(weight, measure, block_bytes, res, g):
    # Backward is cheap streaming math; plain XLA is at HBM roofline already.
    inp, target = res
    B, K, N = inp.shape
    x32 = inp.astype(jnp.float32)
    t32 = target.astype(jnp.float32)
    scale = g * (weight / (B * N))
    if measure == "ce":
        p = jax.nn.softmax(x32, axis=1)
        tsum = jnp.sum(t32, axis=1, keepdims=True)
        grad = scale * (p * tsum - t32)
    else:  # 'kl'
        safe_x = jnp.where(t32 > 0.0, x32, 1.0)
        grad = jnp.where(t32 > 0.0, -scale * t32 / safe_x, 0.0)
    return grad.astype(inp.dtype), jnp.zeros_like(target)


_attention_matching_loss.defvjp(_attn_loss_fwd, _attn_loss_bwd)


def attention_matching_loss(inp, target, *, weight=1.0, measure="ce",
                            block_bytes=_DEFAULT_BLOCK_BYTES):
    assert inp.shape == target.shape
    assert inp.ndim == 3
    assert measure in ("ce", "kl")
    target = jax.lax.stop_gradient(target)  # target.detach()
    return _attention_matching_loss(inp, target, float(weight), measure, int(block_bytes))


def _reference_loss(inp, target, *, weight=1.0, measure="ce"):
    B, K, N = inp.shape
    if measure == "ce":
        logsm = jax.nn.log_softmax(inp, axis=1)
        per_bn = -jnp.sum(target * logsm, axis=1)      # (B, N)
        return weight * jnp.mean(per_bn)
    contrib = jnp.where(target > 0.0, target * (jnp.log(target) - jnp.log(inp)), 0.0)
    return weight * jnp.sum(contrib) / (B * N)


if __name__ == "__main__":
    key = jax.random.PRNGKey(0)
    k1, k2, k3, k4, k5, k6 = jax.random.split(key, 6)

    # Case 1: small canonical shape, CE measure (forward + gradient via custom VJP).
    B, K, N = 2, 8, 16
    inp = jax.random.normal(k1, (B, K, N), dtype=jnp.float32)
    target = jax.nn.softmax(jax.random.normal(k2, (B, K, N), dtype=jnp.float32), axis=1)
    loss = jax.block_until_ready(attention_matching_loss(inp, target, weight=1.0, measure="ce"))
    ref = _reference_loss(inp, target, weight=1.0, measure="ce")
    assert jnp.allclose(loss, ref, atol=1e-5, rtol=1e-5), (loss, ref)

    g_kernel = jax.grad(lambda x: attention_matching_loss(x, target, weight=1.0, measure="ce"))(inp)
    g_ref = jax.grad(lambda x: _reference_loss(x, target, weight=1.0, measure="ce"))(inp)
    assert jnp.allclose(g_kernel, g_ref, atol=1e-5, rtol=1e-5)

    # Case 2: KL measure (probability-valued input).
    inp_p = jax.nn.softmax(inp, axis=1)
    loss_kl = jax.block_until_ready(attention_matching_loss(inp_p, target, weight=0.5, measure="kl"))
    ref_kl = _reference_loss(inp_p, target, weight=0.5, measure="kl")
    assert jnp.allclose(loss_kl, ref_kl, atol=1e-5, rtol=1e-5), (loss_kl, ref_kl)

    # Case 3: ragged N with a deliberately tiny block budget to exercise the lane-tiled
    # path with a masked tail tile.
    B2, K2, N2 = 2, 8, 200
    inp2 = jax.random.normal(k3, (B2, K2, N2), dtype=jnp.float32)
    target2 = jax.nn.softmax(jax.random.normal(k4, (B2, K2, N2), dtype=jnp.float32), axis=1)
    loss2 = jax.block_until_ready(
        attention_matching_loss(inp2, target2, weight=2.0, measure="ce", block_bytes=4096))
    ref2 = _reference_loss(inp2, target2, weight=2.0, measure="ce")
    assert jnp.allclose(loss2, ref2, atol=1e-5, rtol=1e-5), (loss2, ref2)

    # Case 4: batch folding (TB > 1) with bf16 inputs (memory-bound: half the HBM bytes).
    B3, K3, N3 = 6, 8, 128
    inp3 = jax.random.normal(k5, (B3, K3, N3), dtype=jnp.float32)
    target3 = jax.nn.softmax(jax.random.normal(k6, (B3, K3, N3), dtype=jnp.float32), axis=1)
    inp3_bf, target3_bf = inp3.astype(jnp.bfloat16), target3.astype(jnp.bfloat16)
    loss3 = jax.block_until_ready(
        attention_matching_loss(inp3_bf, target3_bf, weight=1.0, measure="ce", block_bytes=16384))
    ref3 = _reference_loss(inp3_bf.astype(jnp.float32), target3_bf.astype(jnp.float32),
                           weight=1.0, measure="ce")
    assert jnp.allclose(loss3, ref3, atol=1e-4, rtol=1e-4), (loss3, ref3)

    print("KERNEL_OK")
</pallas_src>

<mosaic_0001>
module attributes {stable_mosaic.version = 11 : i64} {
  func.func @_attn_match_kernel(%arg0: i32, %arg1: i32, %arg2: memref<2x8x16xf32, #tpu.memory_space<vmem>>, %arg3: memref<2x8x16xf32, #tpu.memory_space<vmem>>, %arg4: memref<1x1x1x1xf32, #tpu.memory_space<vmem>>) attributes {dimension_semantics = [#tpu.dimension_semantics<parallel>, #tpu.dimension_semantics<parallel>], iteration_bounds = array<i64: 1, 1>, scalar_prefetch = 0 : i64, scratch_operands = 0 : i64, tpu.core_type = #tpu.core_type<tc>, window_params = [{transform_indices = @transform_0, window_bounds = array<i64: 2, 8, 16>}, {transform_indices = @transform_1, window_bounds = array<i64: 2, 8, 16>}, {transform_indices = @transform_2, window_bounds = array<i64: 1, 1, 1, 1>}]} {
    %c0 = arith.constant 0 : index
    %c0_0 = arith.constant 0 : index
    %c0_1 = arith.constant 0 : index
    %0 = vector.load %arg2[%c0, %c0_0, %c0_1] : memref<2x8x16xf32, #tpu.memory_space<vmem>>, vector<2x8x16xf32>
    %c0_2 = arith.constant 0 : index
    %c0_3 = arith.constant 0 : index
    %c0_4 = arith.constant 0 : index
    %1 = vector.load %arg3[%c0_2, %c0_3, %c0_4] : memref<2x8x16xf32, #tpu.memory_space<vmem>>, vector<2x8x16xf32>
    %cst = arith.constant dense<0xFF800000> : vector<2x16xf32>
    %2 = vector.multi_reduction <maximumf>, %0, %cst [1] : vector<2x8x16xf32> to vector<2x16xf32>
    %3 = vector.shape_cast %2 : vector<2x16xf32> to vector<2x1x16xf32>
    %4 = vector.broadcast %3 : vector<2x1x16xf32> to vector<2x8x16xf32>
    %5 = arith.subf %0, %4 : vector<2x8x16xf32>
    %6 = math.exp %5 : vector<2x8x16xf32>
    %cst_5 = arith.constant dense<0.000000e+00> : vector<2x16xf32>
    %7 = vector.multi_reduction <add>, %6, %cst_5 [1] : vector<2x8x16xf32> to vector<2x16xf32>
    %8 = vector.shape_cast %7 : vector<2x16xf32> to vector<2x1x16xf32>
    %9 = math.log %8 : vector<2x1x16xf32>
    %cst_6 = arith.constant 0.000000e+00 : f32
    %10 = vector.broadcast %cst_6 : f32 to vector<2x8x16xf32>
    %11 = arith.subf %10, %1 : vector<2x8x16xf32>
    %12 = vector.broadcast %9 : vector<2x1x16xf32> to vector<2x8x16xf32>
    %13 = arith.subf %5, %12 : vector<2x8x16xf32>
    %14 = arith.mulf %11, %13 : vector<2x8x16xf32>
    %15 = vector.shape_cast %14 : vector<2x8x16xf32> to vector<1x2x8x16xf32>
    %cst_7 = arith.constant dense<0.000000e+00> : vector<1xf32>
    %16 = vector.multi_reduction <add>, %15, %cst_7 [1, 2, 3] : vector<1x2x8x16xf32> to vector<1xf32>
    %17 = vector.shape_cast %16 : vector<1xf32> to vector<1x1x1x1xf32>
    %18 = vector.extract %17[0, 0, 0, 0] : f32 from vector<1x1x1x1xf32>
    %19 = vector.broadcast %18 : f32 to vector<1x1x1x1xf32>
    %c0_8 = arith.constant 0 : index
    %c0_9 = arith.constant 0 : index
    %c0_10 = arith.constant 0 : index
    %c0_11 = arith.constant 0 : index
    %20 = vector.load %arg4[%c0_8, %c0_9, %c0_10, %c0_11] : memref<1x1x1x1xf32, #tpu.memory_space<vmem>>, vector<1x1x1x1xf32>
    tpu.vector_store %arg4[%c0_8, %c0_9, %c0_10, %c0_11], %19 {strides = array<i32>} : memref<1x1x1x1xf32, #tpu.memory_space<vmem>>, vector<1x1x1x1xf32>,
    return
  }
  func.func @transform_0(%arg0: i32, %arg1: i32) -> (i32, i32, i32) {
    %c0_i32 = arith.constant 0 : i32
    %c0_i32_0 = arith.constant 0 : i32
    return %arg0, %c0_i32, %arg1 : i32, i32, i32
  }
  func.func @transform_1(%arg0: i32, %arg1: i32) -> (i32, i32, i32) {
    %c0_i32 = arith.constant 0 : i32
    %c0_i32_0 = arith.constant 0 : i32
    return %arg0, %c0_i32, %arg1 : i32, i32, i32
  }
  func.func @transform_2(%arg0: i32, %arg1: i32) -> (i32, i32, i32, i32) {
    %c0_i32 = arith.constant 0 : i32
    %c0_i32_0 = arith.constant 0 : i32
    %c0_i32_1 = arith.constant 0 : i32
    return %arg0, %arg1, %c0_i32, %c0_i32_0 : i32, i32, i32, i32
  }
}

</mosaic_0001>

<llo_original>
// kernel: tpu_custom_call.1
$region0: #{tpu_custom_call.1}
  #allocation0 [shape = 'u32[]', space=smem, size = 0x4, offset = 0x4, fixed_abs, tag = 'smem constant byte address 0x4 - core index']
  #allocation1 [shape = 'u32[144,128]{1,0:T(1,128)}', space=vmem, size = 0x12000, scoped, tag = 'internal scratch']
  %s0 = inlined_call_operand.hbm [shape: f32[2,8,16], index: 0, kind: input, shape index: {}]
  %s1 = inlined_call_operand.hbm [shape: f32[2,8,16], index: 1, kind: input, shape index: {}]
  %s2 = inlined_call_operand.hbm [shape: f32[1,1,1,1], index: 2, kind: output, shape index: {}]
  %s3 = sld [smem:[#allocation0]]
  $region26: #{tpu_custom_call.1} parent=0
    _
  %s5 = ssub.s32 1, %s3
  %s6 = scalar_select 0, %s5, %s3
  $region1: #{tpu_custom_call.1} parent=0
    #allocation2 [shape = 'u8[8192]{0}', space=vmem, size = 0x2000, scoped, tag = 'input window, operand 0, single buffered']
    #allocation3 [shape = 's32[1]{0}', space=sflag, size = 0x4, scoped, tag = 'scoped memory for tpu_custom_call.1']
    #allocation4 [shape = 's32[1]{0}', space=sflag, size = 0x4, scoped, tag = 'scoped memory for tpu_custom_call.1']
    #allocation5 [shape = 'u8[8192]{0}', space=vmem, size = 0x2000, scoped, tag = 'input window, operand 1, single buffered']
    #allocation6 [shape = 's32[1]{0}', space=sflag, size = 0x4, scoped, tag = 'scoped memory for tpu_custom_call.1']
    #allocation7 [shape = 'u8[512]{0}', space=vmem, size = 0x400, scoped, tag = 'output window, operand 0, single buffered']
    %7 = vsyncpa [#allocation3], 0
    %8 = vsyncpa [#allocation6], 0
    %9 = vsyncpa [#allocation4], 0
    // Predicated region
    $region2: #{tpu_custom_call.1} parent=1 // pred_check
      _
    $region3: #{tpu_custom_call.1} parent=1 // pred_check_branch
      %11 = sbr.rel (0) target = $region5
    $region4: #{tpu_custom_call.1} parent=1 // pred_region
      %s13 = ssub.s32 256, 256
      %14 = vsyncadd [#allocation3], %s13
      %s15 = sshll.u32 [#allocation2], 4
      %s16 = int_to_ptr.vmem [resolvable:$true] %s15
      %21 = dma.hbm_to_vmem [thread:$0]  %s0, 256, %s16, [#allocation3], 128, 128, 8
    $region5: #{tpu_custom_call.1} parent=1 // pred_fallthru
      _
    // Predicated region
    $region6: #{tpu_custom_call.1} parent=1 // pred_check
      _
    $region7: #{tpu_custom_call.1} parent=1 // pred_check_branch
      %23 = sbr.rel (0) target = $region9
    $region8: #{tpu_custom_call.1} parent=1 // pred_region
      %s25 = ssub.s32 256, 256
      %26 = vsyncadd [#allocation6], %s25
      %s27 = sshll.u32 [#allocation5], 4
      %s28 = int_to_ptr.vmem [resolvable:$true] %s27
      %33 = dma.hbm_to_vmem [thread:$0]  %s1, 256, %s28, [#allocation6], 128, 128, 8
    $region9: #{tpu_custom_call.1} parent=1 // pred_fallthru
      _
    // Predicated region
    $region10: #{tpu_custom_call.1} parent=1 // pred_check
      _
    $region11: #{tpu_custom_call.1} parent=1 // pred_check_branch
      %35 = sbr.rel (0) target = $region13
    $region12: #{tpu_custom_call.1} parent=1 // pred_region
      %36 = dma.done [#allocation3], 256
    $region13: #{tpu_custom_call.1} parent=1 // pred_fallthru
      _
    // Predicated region
    $region14: #{tpu_custom_call.1} parent=1 // pred_check
      _
    $region15: #{tpu_custom_call.1} parent=1 // pred_check_branch
      %38 = sbr.rel (0) target = $region17
    $region16: #{tpu_custom_call.1} parent=1 // pred_region
      %39 = dma.done [#allocation6], 256
    $region17: #{tpu_custom_call.1} parent=1 // pred_fallthru
      _
    %v40 = vld [vmem:[#allocation2] sm:$0xff]
    %v41 = vld [vmem:[#allocation2 + $0x8] sm:$0xff]
    %v42 = vld [vmem:[#allocation5] sm:$0xff]
    %v43 = vld [vmem:[#allocation5 + $0x8] sm:$0xff]
    %vm44 = vcmask 130048
    %v45 = vsel %vm44, %v40, -inf
    %v46 = vrot.slane %v45, 4
    %v47 = vmax.f32 %v45, %v46
    %v48 = vrot.slane %v47, 2
    %v49 = vmax.f32 %v47, %v48
    %v50 = vrot.slane %v49, 1
    %v51 = vmax.f32 %v49, %v50
    %v52 = vsel %vm44, %v41, -inf
    %v53 = vrot.slane %v52, 4
    %v54 = vmax.f32 %v52, %v53
    %v55 = vrot.slane %v54, 2
    %v56 = vmax.f32 %v54, %v55
    %v57 = vrot.slane %v56, 1
    %v58 = vmax.f32 %v56, %v57
    %v59 = vsub.f32 %v40, %v51
    %v60 = vsub.f32 %v41, %v58
    %v61 = vmul.f32 %v59, 1.442695
    %v62 = vpow.pop %v61
    %v63 = vmul.f32 %v60, 1.442695
    %v64 = vpow.pop %v63
    %v65 = vsel %vm44, %v62, 0.0
    %v66 = vrot.slane %v65, 4
    %v67 = vadd.f32 %v65, %v66
    %v68 = vrot.slane %v67, 2
    %v69 = vadd.f32 %v67, %v68
    %v70 = vrot.slane %v69, 1
    %v71 = vadd.f32 %v69, %v70
    %v72 = vsel %vm44, %v64, 0.0
    %v73 = vrot.slane %v72, 4
    %v74 = vadd.f32 %v72, %v73
    %v75 = vrot.slane %v74, 2
    %v76 = vadd.f32 %v74, %v75
    %v77 = vrot.slane %v76, 1
    %v78 = vadd.f32 %v76, %v77
    %v79 = vlog2.pop %v71
    %v80 = vmul.f32 %v79, 0.6931472
    %v81 = vlog2.pop %v78
    %v82 = vmul.f32 %v81, 0.6931472
    %v83 = vsub.f32 0.0, %v42
    %v84 = vsub.f32 0.0, %v43
    %v85 = vsub.f32 %v59, %v80
    %v86 = vsub.f32 %v60, %v82
    %v87 = vmul.f32 %v83, %v85
    %v88 = vmul.f32 %v84, %v86
    %v89 = vsel %vm44, %v87, 0.0
    %v90 = vsel %vm44, %v88, 0.0
    %v91 = vadd.f32 %v89, %v90
    %92 = vadd.xlane.f32.xlu0 %v91
    %v93 = vpop.xlane.xlu0 %92
    %v94 = vrot.slane %v93, 4
    %v95 = vadd.f32 %v93, %v94
    %v96 = vrot.slane %v95, 2
    %v97 = vadd.f32 %v95, %v96
    %v98 = vrot.slane %v97, 1
    %v99 = vadd.f32 %v97, %v98
    %s100 = vtos %v99
    %v101 = vstv %s100
    %vm102 = vcmask 0
    %103 = vst.msk [vmem:[#allocation7] sm:$0x1] %vm102, %v101
    // Predicated region
    $region18: #{tpu_custom_call.1} parent=1 // pred_check
      _
    $region19: #{tpu_custom_call.1} parent=1 // pred_check_branch
      %105 = sbr.rel (0) target = $region21
    $region20: #{tpu_custom_call.1} parent=1 // pred_region
      %s107 = ssub.s32 16, 16
      %108 = vsyncadd [#allocation4], %s107
      %s110 = sshll.u32 [#allocation7], 4
      %s111 = int_to_ptr.vmem [resolvable:$true] %s110
      %113 = dma.vmem_to_hbm [thread:$0]  %s111, 16, %s2, [#allocation4]
    $region21: #{tpu_custom_call.1} parent=1 // pred_fallthru
      _
    // Predicated region
    $region22: #{tpu_custom_call.1} parent=1 // pred_check
      _
    $region23: #{tpu_custom_call.1} parent=1 // pred_check_branch
      %115 = sbr.rel (0) target = $region25
    $region24: #{tpu_custom_call.1} parent=1 // pred_region
      %116 = dma.done [#allocation4], 16
    $region25: #{tpu_custom_call.1} parent=1 // pred_fallthru
      _
    %117 = vsyncpa [#allocation3], 1
    %118 = vsyncpa [#allocation6], 1
    %119 = vsyncpa [#allocation4], 1

</llo_original>
